<compile_context>
chip_gen: v5e
topology: v5e:2x2
jax: 0.10.0
libtpu: 0.0.40
codegen_flags: <defaults>
</compile_context>

<pallas_src>
import math
from functools import partial

import jax
import jax.numpy as jnp
import numpy as np
from jax.experimental import pallas as pl
from jax.experimental.pallas import tpu as pltpu

D_MODEL = 32
N_HEAD = 4
HEAD_DIM = D_MODEL // N_HEAD
LN_EPS = 1e-5

# Slab A (QKV), shape (D+1, 3D):
#   rows [0, D) : diag(ln1w) @ [Wq^T * 1/sqrt(dh) | Wk^T | Wv^T]
#   row  D      : ln1b @ Wqkv_scaled + bqkv_scaled
# Slab B (output/MLP), shape (2D+1, D):
#   rows [0, D)   : Wo^T                      (out_proj weight, transposed)
#   rows [D, 2D)  : diag(ln2w) @ Wc^T         (mlp.c_proj weight, LN folded)
#   row  2D       : bo + (ln2b @ Wc^T + bc)   (fused bias)
_ROW_WO = 0
_ROW_WC = D_MODEL
_ROW_BIAS = 2 * D_MODEL
_B_SLAB_ROWS = _ROW_BIAS + 1


def _layernorm(x, w, b):
    mu = jnp.mean(x, axis=-1, keepdims=True)
    var = jnp.mean(jnp.square(x - mu), axis=-1, keepdims=True)
    return (x - mu) * jax.lax.rsqrt(var + LN_EPS) * w + b


def _block_kernel(x_ref, a_ref, b_ref, o_ref, *, seq_len, bb):
    """Processes a block of `bb` batch elements in one grid step.

    x_ref: (bb*L, D)      flattened activations
    a_ref: (D+1, 3D)      QKV slab (LN1 affine + 1/sqrt(dh) pre-folded)
    b_ref: (2D+1, D)      [Wo^T ; ln2-folded Wc^T ; fused bias]
    o_ref: (1, bb, D)     per-batch max over the sequence axis
    """
    D, H, dh, L = D_MODEL, N_HEAD, HEAD_DIM, seq_len
    x = x_ref[...]                                               # (bb*L, D) f32

    # --- Shared LayerNorm statistics; affines live in the weight slabs. ---
    mu = jnp.mean(x, axis=-1, keepdims=True)
    var = jnp.mean(jnp.square(x - mu), axis=-1, keepdims=True)
    xn = (x - mu) * jax.lax.rsqrt(var + LN_EPS)                  # (bb*L, D)

    w_dt = a_ref.dtype
    xn_mm = xn if w_dt == jnp.float32 else xn.astype(w_dt)

    # --- Fused QKV projection: one (bb*L, D) x (D, 3D) MXU push. ---
    qkv = (jnp.dot(xn_mm, a_ref[0:D, :], preferred_element_type=jnp.float32)
           + a_ref[D:D + 1, :].astype(jnp.float32))              # (bb*L, 3D)

    # Split to (bb, L, D); leading-dim split only (layout-free for L = 8).
    q3 = qkv[:, 0:D].reshape(bb, L, D)
    k3 = qkv[:, D:2 * D].reshape(bb, L, D)
    v3 = qkv[:, 2 * D:3 * D].reshape(bb, L, D)

    # --- Attention: batched over bb (dot_general batch dim), static 4-head
    #     unroll over the lane-axis head split. ---
    heads = []
    for h in range(H):
        c0 = h * dh
        qh = q3[:, :, c0:c0 + dh]                                # (bb, L, dh)
        kh = k3[:, :, c0:c0 + dh]
        vh = v3[:, :, c0:c0 + dh]
        s = jnp.einsum("bqd,bkd->bqk", qh, kh,
                       preferred_element_type=jnp.float32)        # (bb, L, L)
        s = s - jnp.max(s, axis=-1, keepdims=True)
        p = jnp.exp(s)
        p = p * pl.reciprocal(jnp.sum(p, axis=-1, keepdims=True))  # exact
        heads.append(jnp.einsum("bqk,bkd->bqd", p, vh,
                                preferred_element_type=jnp.float32))
    attn = jnp.concatenate(heads, axis=-1).reshape(bb * L, D)     # (bb*L, D)
    attn_mm = attn if w_dt == jnp.float32 else attn.astype(w_dt)

    # --- out_proj + mlp.c_proj as two dots into one f32 accumulator:
    #     y = attn @ Wo^T + xn @ (ln2-folded Wc^T) + fused bias. ---
    y = (jnp.dot(attn_mm, b_ref[_ROW_WO:_ROW_WO + D, :],
                 preferred_element_type=jnp.float32)
         + jnp.dot(xn_mm, b_ref[_ROW_WC:_ROW_WC + D, :],
                   preferred_element_type=jnp.float32)
         + b_ref[_ROW_BIAS:_ROW_BIAS + 1, :].astype(jnp.float32))  # (bb*L, D)

    # --- AdaptiveMaxPool2d((1, None)) == max over the sequence axis. ---
    o_ref[0] = jnp.max(y.reshape(bb, L, D), axis=1)               # (bb, D)


def residual_self_attention_block(x, packed, *, num_blocks=1):
    """x: (B, L, D) -> (B, D).

    num_blocks=1 (default): whole batch in one grid step — best on v5e/v6e
    and also on v7x at small sizes (the kernel moves ~24 KiB; a megacore
    split only doubles fixed per-step overhead).  Raise num_blocks (grid
    streams batch blocks, "parallel") only when per-block rows BB*L reach a
    few hundred; cap BB*L around 512-1024 rows when scaling so the live set
    stays within the vreg budget and v7x's 64 MiB VMEM.  When B*D >= 128,
    a lane-dense output layout is worth adding; at B=2 it is negligible.
    """
    B, L, D = x.shape
    assert D == D_MODEL and B % num_blocks == 0
    BB = B // num_blocks
    assert num_blocks == 1 or (BB * L) % 8 == 0, "activation block must be 8-row aligned"
    a_slab, b_slab = packed

    x2 = x.reshape(B * L, D)                                      # flatten host-side
    kernel = partial(_block_kernel, seq_len=L, bb=BB)

    out = pl.pallas_call(
        kernel,
        out_shape=jax.ShapeDtypeStruct((num_blocks, BB, D), jnp.float32),
        grid=(num_blocks,),
        in_specs=[
            pl.BlockSpec((BB * L, D), lambda i: (i, 0)),          # activations
            pl.BlockSpec(a_slab.shape, lambda i: (0, 0)),         # QKV slab
            pl.BlockSpec(b_slab.shape, lambda i: (0, 0)),         # Wo/Wc/bias slab
        ],
        out_specs=pl.BlockSpec((1, BB, D), lambda i: (i, 0, 0)),  # full (BB,D) tile
        compiler_params=pltpu.CompilerParams(
            dimension_semantics=("parallel",)),
    )(x2, a_slab, b_slab)
    return out.reshape(B, D)


def make_params(key, param_dtype=jnp.float32):
    """Deterministic init mirroring ResidualSelfAttentionBlock.__init__.

    param_dtype=jnp.bfloat16 halves parameter DMA bytes / weight vreg
    footprint (recommended on v6e/v7x at scale); the kernel then casts the
    matmul activations to bf16 and accumulates in f32.  Default f32 keeps
    bit-level parity with the reference.
    """
    k_in, k_out, k_c = jax.random.split(key, 3)
    D = D_MODEL
    in_proj_w = 0.1 * jax.random.normal(k_in, (3 * D, D), jnp.float32)     # std=0.1
    in_proj_b = jnp.zeros((3 * D,), jnp.float32)
    out_w = 0.1 * jax.random.normal(k_out, (D, D), jnp.float32)            # std=0.1
    out_b = jnp.zeros((D,), jnp.float32)
    c_w = 0.001 * jax.random.normal(k_c, (D, D), jnp.float32)              # std=0.001
    c_b = jnp.zeros((D,), jnp.float32)
    ln1w = jnp.ones((D,), jnp.float32); ln1b = jnp.zeros((D,), jnp.float32)
    ln2w = jnp.ones((D,), jnp.float32); ln2b = jnp.zeros((D,), jnp.float32)
    raw = dict(in_proj_w=in_proj_w, in_proj_b=in_proj_b, out_w=out_w, out_b=out_b,
               c_w=c_w, c_b=c_b, ln1w=ln1w, ln1b=ln1b, ln2w=ln2w, ln2b=ln2b)

    # ---- Pack everything into two flat slabs, LN affines folded in. ----
    scale = 1.0 / math.sqrt(HEAD_DIM)
    wq, wk, wv = in_proj_w[:D], in_proj_w[D:2 * D], in_proj_w[2 * D:]
    bq, bk, bv = in_proj_b[:D], in_proj_b[D:2 * D], in_proj_b[2 * D:]
    # QKV in `x @ W` form, 1/sqrt(dh) folded into the Q columns.
    wqkv_s = jnp.concatenate([wq.T * scale, wk.T, wv.T], axis=1)           # (D, 3D)
    bqkv_s = jnp.concatenate([bq * scale, bk, bv])                         # (3D,)
    # Fold ln_1 affine:  ln1(x) @ W + b == xn @ (diag(ln1w) W) + (ln1b @ W + b)
    w_a = ln1w[:, None] * wqkv_s
    b_a = ln1b @ wqkv_s + bqkv_s
    a_slab = jnp.concatenate([w_a, b_a[None, :]], axis=0)                  # (33, 96)

    # Fold ln_2 affine into the MLP projection, fuse both biases.
    wo_t = out_w.T                                                         # (D, D)
    wc_t = ln2w[:, None] * c_w.T                                           # (D, D)
    bias = out_b + (ln2b @ c_w.T + c_b)                                    # (D,)
    b_slab = jnp.concatenate([wo_t, wc_t, bias[None, :]], axis=0)          # (65, 32)
    assert b_slab.shape == (_B_SLAB_ROWS, D)

    return raw, (a_slab.astype(param_dtype), b_slab.astype(param_dtype))


def ref_forward(x, raw):
    """Pure-JAX reference mirroring the PyTorch forward."""
    D = D_MODEL
    ln1x = _layernorm(x, raw["ln1w"], raw["ln1b"])
    qkv = ln1x @ raw["in_proj_w"].T + raw["in_proj_b"]
    q, k, v = qkv[..., :D], qkv[..., D:2 * D], qkv[..., 2 * D:]
    B, L, _ = x.shape
    sh = lambda t: t.reshape(B, L, N_HEAD, HEAD_DIM).transpose(0, 2, 1, 3)
    q, k, v = sh(q), sh(k), sh(v)
    s = jnp.einsum("bhqd,bhkd->bhqk", q, k) / math.sqrt(HEAD_DIM)
    p = jax.nn.softmax(s, axis=-1)
    o = jnp.einsum("bhqk,bhkd->bhqd", p, v).transpose(0, 2, 1, 3).reshape(B, L, D)
    attn = o @ raw["out_w"].T + raw["out_b"]
    mlp = _layernorm(x, raw["ln2w"], raw["ln2b"]) @ raw["c_w"].T + raw["c_b"]
    y = attn + mlp
    return jnp.max(y, axis=1)                                   # AdaptiveMaxPool2d((1,None))


if __name__ == "__main__":
    key = jax.random.PRNGKey(0)
    kx, kp = jax.random.split(key)
    B, L = 2, 8
    x = jax.random.normal(kx, (B, L, D_MODEL), jnp.float32)     # [batch, seq, d_model]

    raw, packed = make_params(kp)                               # f32 slabs (exact)

    out = residual_self_attention_block(x, packed)              # single grid step
    out = jax.block_until_ready(out)

    ref = jax.block_until_ready(ref_forward(x, raw))
    assert out.shape == (B, D_MODEL)
    np.testing.assert_allclose(np.asarray(out), np.asarray(ref), rtol=1e-5, atol=1e-5)

    print("KERNEL_OK")
</pallas_src>

<mosaic_0001>
module attributes {stable_mosaic.version = 11 : i64} {
  func.func @_block_kernel(%arg0: i32, %arg1: memref<16x32xf32, #tpu.memory_space<vmem>>, %arg2: memref<33x96xf32, #tpu.memory_space<vmem>>, %arg3: memref<65x32xf32, #tpu.memory_space<vmem>>, %arg4: memref<1x2x32xf32, #tpu.memory_space<vmem>>) attributes {dimension_semantics = [#tpu.dimension_semantics<parallel>], iteration_bounds = array<i64: 1>, scalar_prefetch = 0 : i64, scratch_operands = 0 : i64, tpu.core_type = #tpu.core_type<tc>, window_params = [{transform_indices = @transform_0, window_bounds = array<i64: 16, 32>}, {pipeline_mode = #tpu.pipeline_mode<synchronous>, transform_indices = @transform_1, window_bounds = array<i64: 33, 96>}, {pipeline_mode = #tpu.pipeline_mode<synchronous>, transform_indices = @transform_2, window_bounds = array<i64: 65, 32>}, {transform_indices = @transform_3, window_bounds = array<i64: 1, 2, 32>}]} {
    %c0 = arith.constant 0 : index
    %c0_0 = arith.constant 0 : index
    %0 = vector.load %arg1[%c0, %c0_0] : memref<16x32xf32, #tpu.memory_space<vmem>>, vector<16x32xf32>
    %cst = arith.constant dense<0.000000e+00> : vector<16xf32>
    %1 = vector.multi_reduction <add>, %0, %cst [1] : vector<16x32xf32> to vector<16xf32>
    %2 = vector.shape_cast %1 : vector<16xf32> to vector<16x1xf32>
    %cst_1 = arith.constant 3.200000e+01 : f32
    %3 = vector.broadcast %cst_1 : f32 to vector<16x1xf32>
    %4 = arith.divf %2, %3 : vector<16x1xf32>
    %5 = vector.broadcast %4 : vector<16x1xf32> to vector<16x32xf32>
    %6 = arith.subf %0, %5 : vector<16x32xf32>
    %7 = arith.mulf %6, %6 : vector<16x32xf32>
    %cst_2 = arith.constant dense<0.000000e+00> : vector<16xf32>
    %8 = vector.multi_reduction <add>, %7, %cst_2 [1] : vector<16x32xf32> to vector<16xf32>
    %9 = vector.shape_cast %8 : vector<16xf32> to vector<16x1xf32>
    %cst_3 = arith.constant 3.200000e+01 : f32
    %10 = vector.broadcast %cst_3 : f32 to vector<16x1xf32>
    %11 = arith.divf %9, %10 : vector<16x1xf32>
    %12 = vector.broadcast %4 : vector<16x1xf32> to vector<16x32xf32>
    %13 = arith.subf %0, %12 : vector<16x32xf32>
    %cst_4 = arith.constant 9.99999974E-6 : f32
    %14 = vector.broadcast %cst_4 : f32 to vector<16x1xf32>
    %15 = arith.addf %11, %14 : vector<16x1xf32>
    %16 = math.rsqrt %15 : vector<16x1xf32>
    %17 = vector.broadcast %16 : vector<16x1xf32> to vector<16x32xf32>
    %18 = arith.mulf %13, %17 : vector<16x32xf32>
    %c0_5 = arith.constant 0 : index
    %c0_6 = arith.constant 0 : index
    %19 = vector.load %arg2[%c0_5, %c0_6] : memref<33x96xf32, #tpu.memory_space<vmem>>, vector<32x96xf32>
    %cst_7 = arith.constant dense<0.000000e+00> : vector<16x96xf32>
    %20 = tpu.matmul %18, %19, %cst_7 {dimension_numbers = #tpu.dot_dimension_numbers<[1], [0], [0], [1], [0, 0, 1, 1], [], []>} : vector<16x32xf32>, vector<32x96xf32>, vector<16x96xf32> -> vector<16x96xf32>
    %c32 = arith.constant 32 : index
    %c0_8 = arith.constant 0 : index
    %21 = vector.load %arg2[%c32, %c0_8] : memref<33x96xf32, #tpu.memory_space<vmem>>, vector<1x96xf32>
    %22 = vector.broadcast %21 : vector<1x96xf32> to vector<16x96xf32>
    %23 = arith.addf %20, %22 : vector<16x96xf32>
    %24 = vector.extract_strided_slice %23 {offsets = [0, 0], sizes = [16, 32], strides = [1, 1]} : vector<16x96xf32> to vector<16x32xf32>
    %25 = vector.shape_cast %24 : vector<16x32xf32> to vector<2x8x32xf32>
    %26 = vector.extract_strided_slice %23 {offsets = [0, 32], sizes = [16, 32], strides = [1, 1]} : vector<16x96xf32> to vector<16x32xf32>
    %27 = vector.shape_cast %26 : vector<16x32xf32> to vector<2x8x32xf32>
    %28 = vector.extract_strided_slice %23 {offsets = [0, 64], sizes = [16, 32], strides = [1, 1]} : vector<16x96xf32> to vector<16x32xf32>
    %29 = vector.shape_cast %28 : vector<16x32xf32> to vector<2x8x32xf32>
    %30 = vector.extract_strided_slice %25 {offsets = [0, 0, 0], sizes = [2, 8, 8], strides = [1, 1, 1]} : vector<2x8x32xf32> to vector<2x8x8xf32>
    %31 = vector.extract_strided_slice %27 {offsets = [0, 0, 0], sizes = [2, 8, 8], strides = [1, 1, 1]} : vector<2x8x32xf32> to vector<2x8x8xf32>
    %32 = vector.extract_strided_slice %29 {offsets = [0, 0, 0], sizes = [2, 8, 8], strides = [1, 1, 1]} : vector<2x8x32xf32> to vector<2x8x8xf32>
    "tpu.trace_start"() <{level = 10 : i32, message = "bqd,bkd->bqk"}> : () -> ()
    %cst_9 = arith.constant dense<0.000000e+00> : vector<2x8x8xf32>
    %33 = tpu.matmul %30, %31, %cst_9 {dimension_numbers = #tpu.dot_dimension_numbers<[2], [2], [1], [1], [0, 0, 0, 1, 1, 1], [0], [0]>} : vector<2x8x8xf32>, vector<2x8x8xf32>, vector<2x8x8xf32> -> vector<2x8x8xf32>
    "tpu.trace_stop"() : () -> ()
    %cst_10 = arith.constant dense<0xFF800000> : vector<2x8xf32>
    %34 = vector.multi_reduction <maximumf>, %33, %cst_10 [2] : vector<2x8x8xf32> to vector<2x8xf32>
    %35 = vector.shape_cast %34 : vector<2x8xf32> to vector<2x8x1xf32>
    %36 = vector.broadcast %35 : vector<2x8x1xf32> to vector<2x8x8xf32>
    %37 = arith.subf %33, %36 : vector<2x8x8xf32>
    %38 = math.exp %37 : vector<2x8x8xf32>
    %cst_11 = arith.constant dense<0.000000e+00> : vector<2x8xf32>
    %39 = vector.multi_reduction <add>, %38, %cst_11 [2] : vector<2x8x8xf32> to vector<2x8xf32>
    %40 = vector.shape_cast %39 : vector<2x8xf32> to vector<2x8x1xf32>
    %41 = tpu.reciprocal %40 : vector<2x8x1xf32> -> vector<2x8x1xf32>
    %42 = vector.broadcast %41 : vector<2x8x1xf32> to vector<2x8x8xf32>
    %43 = arith.mulf %38, %42 : vector<2x8x8xf32>
    "tpu.trace_start"() <{level = 10 : i32, message = "bqk,bkd->bqd"}> : () -> ()
    %cst_12 = arith.constant dense<0.000000e+00> : vector<2x8x8xf32>
    %44 = tpu.matmul %43, %32, %cst_12 {dimension_numbers = #tpu.dot_dimension_numbers<[2], [1], [1], [2], [0, 0, 0, 1, 1, 2], [0], [0]>} : vector<2x8x8xf32>, vector<2x8x8xf32>, vector<2x8x8xf32> -> vector<2x8x8xf32>
    "tpu.trace_stop"() : () -> ()
    %45 = vector.extract_strided_slice %25 {offsets = [0, 0, 8], sizes = [2, 8, 8], strides = [1, 1, 1]} : vector<2x8x32xf32> to vector<2x8x8xf32>
    %46 = vector.extract_strided_slice %27 {offsets = [0, 0, 8], sizes = [2, 8, 8], strides = [1, 1, 1]} : vector<2x8x32xf32> to vector<2x8x8xf32>
    %47 = vector.extract_strided_slice %29 {offsets = [0, 0, 8], sizes = [2, 8, 8], strides = [1, 1, 1]} : vector<2x8x32xf32> to vector<2x8x8xf32>
    "tpu.trace_start"() <{level = 10 : i32, message = "bqd,bkd->bqk"}> : () -> ()
    %cst_13 = arith.constant dense<0.000000e+00> : vector<2x8x8xf32>
    %48 = tpu.matmul %45, %46, %cst_13 {dimension_numbers = #tpu.dot_dimension_numbers<[2], [2], [1], [1], [0, 0, 0, 1, 1, 1], [0], [0]>} : vector<2x8x8xf32>, vector<2x8x8xf32>, vector<2x8x8xf32> -> vector<2x8x8xf32>
    "tpu.trace_stop"() : () -> ()
    %cst_14 = arith.constant dense<0xFF800000> : vector<2x8xf32>
    %49 = vector.multi_reduction <maximumf>, %48, %cst_14 [2] : vector<2x8x8xf32> to vector<2x8xf32>
    %50 = vector.shape_cast %49 : vector<2x8xf32> to vector<2x8x1xf32>
    %51 = vector.broadcast %50 : vector<2x8x1xf32> to vector<2x8x8xf32>
    %52 = arith.subf %48, %51 : vector<2x8x8xf32>
    %53 = math.exp %52 : vector<2x8x8xf32>
    %cst_15 = arith.constant dense<0.000000e+00> : vector<2x8xf32>
    %54 = vector.multi_reduction <add>, %53, %cst_15 [2] : vector<2x8x8xf32> to vector<2x8xf32>
    %55 = vector.shape_cast %54 : vector<2x8xf32> to vector<2x8x1xf32>
    %56 = tpu.reciprocal %55 : vector<2x8x1xf32> -> vector<2x8x1xf32>
    %57 = vector.broadcast %56 : vector<2x8x1xf32> to vector<2x8x8xf32>
    %58 = arith.mulf %53, %57 : vector<2x8x8xf32>
    "tpu.trace_start"() <{level = 10 : i32, message = "bqk,bkd->bqd"}> : () -> ()
    %cst_16 = arith.constant dense<0.000000e+00> : vector<2x8x8xf32>
    %59 = tpu.matmul %58, %47, %cst_16 {dimension_numbers = #tpu.dot_dimension_numbers<[2], [1], [1], [2], [0, 0, 0, 1, 1, 2], [0], [0]>} : vector<2x8x8xf32>, vector<2x8x8xf32>, vector<2x8x8xf32> -> vector<2x8x8xf32>
    "tpu.trace_stop"() : () -> ()
    %60 = vector.extract_strided_slice %25 {offsets = [0, 0, 16], sizes = [2, 8, 8], strides = [1, 1, 1]} : vector<2x8x32xf32> to vector<2x8x8xf32>
    %61 = vector.extract_strided_slice %27 {offsets = [0, 0, 16], sizes = [2, 8, 8], strides = [1, 1, 1]} : vector<2x8x32xf32> to vector<2x8x8xf32>
    %62 = vector.extract_strided_slice %29 {offsets = [0, 0, 16], sizes = [2, 8, 8], strides = [1, 1, 1]} : vector<2x8x32xf32> to vector<2x8x8xf32>
    "tpu.trace_start"() <{level = 10 : i32, message = "bqd,bkd->bqk"}> : () -> ()
    %cst_17 = arith.constant dense<0.000000e+00> : vector<2x8x8xf32>
    %63 = tpu.matmul %60, %61, %cst_17 {dimension_numbers = #tpu.dot_dimension_numbers<[2], [2], [1], [1], [0, 0, 0, 1, 1, 1], [0], [0]>} : vector<2x8x8xf32>, vector<2x8x8xf32>, vector<2x8x8xf32> -> vector<2x8x8xf32>
    "tpu.trace_stop"() : () -> ()
    %cst_18 = arith.constant dense<0xFF800000> : vector<2x8xf32>
    %64 = vector.multi_reduction <maximumf>, %63, %cst_18 [2] : vector<2x8x8xf32> to vector<2x8xf32>
    %65 = vector.shape_cast %64 : vector<2x8xf32> to vector<2x8x1xf32>
    %66 = vector.broadcast %65 : vector<2x8x1xf32> to vector<2x8x8xf32>
    %67 = arith.subf %63, %66 : vector<2x8x8xf32>
    %68 = math.exp %67 : vector<2x8x8xf32>
    %cst_19 = arith.constant dense<0.000000e+00> : vector<2x8xf32>
    %69 = vector.multi_reduction <add>, %68, %cst_19 [2] : vector<2x8x8xf32> to vector<2x8xf32>
    %70 = vector.shape_cast %69 : vector<2x8xf32> to vector<2x8x1xf32>
    %71 = tpu.reciprocal %70 : vector<2x8x1xf32> -> vector<2x8x1xf32>
    %72 = vector.broadcast %71 : vector<2x8x1xf32> to vector<2x8x8xf32>
    %73 = arith.mulf %68, %72 : vector<2x8x8xf32>
    "tpu.trace_start"() <{level = 10 : i32, message = "bqk,bkd->bqd"}> : () -> ()
    %cst_20 = arith.constant dense<0.000000e+00> : vector<2x8x8xf32>
    %74 = tpu.matmul %73, %62, %cst_20 {dimension_numbers = #tpu.dot_dimension_numbers<[2], [1], [1], [2], [0, 0, 0, 1, 1, 2], [0], [0]>} : vector<2x8x8xf32>, vector<2x8x8xf32>, vector<2x8x8xf32> -> vector<2x8x8xf32>
    "tpu.trace_stop"() : () -> ()
    %75 = vector.extract_strided_slice %25 {offsets = [0, 0, 24], sizes = [2, 8, 8], strides = [1, 1, 1]} : vector<2x8x32xf32> to vector<2x8x8xf32>
    %76 = vector.extract_strided_slice %27 {offsets = [0, 0, 24], sizes = [2, 8, 8], strides = [1, 1, 1]} : vector<2x8x32xf32> to vector<2x8x8xf32>
    %77 = vector.extract_strided_slice %29 {offsets = [0, 0, 24], sizes = [2, 8, 8], strides = [1, 1, 1]} : vector<2x8x32xf32> to vector<2x8x8xf32>
    "tpu.trace_start"() <{level = 10 : i32, message = "bqd,bkd->bqk"}> : () -> ()
    %cst_21 = arith.constant dense<0.000000e+00> : vector<2x8x8xf32>
    %78 = tpu.matmul %75, %76, %cst_21 {dimension_numbers = #tpu.dot_dimension_numbers<[2], [2], [1], [1], [0, 0, 0, 1, 1, 1], [0], [0]>} : vector<2x8x8xf32>, vector<2x8x8xf32>, vector<2x8x8xf32> -> vector<2x8x8xf32>
    "tpu.trace_stop"() : () -> ()
    %cst_22 = arith.constant dense<0xFF800000> : vector<2x8xf32>
    %79 = vector.multi_reduction <maximumf>, %78, %cst_22 [2] : vector<2x8x8xf32> to vector<2x8xf32>
    %80 = vector.shape_cast %79 : vector<2x8xf32> to vector<2x8x1xf32>
    %81 = vector.broadcast %80 : vector<2x8x1xf32> to vector<2x8x8xf32>
    %82 = arith.subf %78, %81 : vector<2x8x8xf32>
    %83 = math.exp %82 : vector<2x8x8xf32>
    %cst_23 = arith.constant dense<0.000000e+00> : vector<2x8xf32>
    %84 = vector.multi_reduction <add>, %83, %cst_23 [2] : vector<2x8x8xf32> to vector<2x8xf32>
    %85 = vector.shape_cast %84 : vector<2x8xf32> to vector<2x8x1xf32>
    %86 = tpu.reciprocal %85 : vector<2x8x1xf32> -> vector<2x8x1xf32>
    %87 = vector.broadcast %86 : vector<2x8x1xf32> to vector<2x8x8xf32>
    %88 = arith.mulf %83, %87 : vector<2x8x8xf32>
    "tpu.trace_start"() <{level = 10 : i32, message = "bqk,bkd->bqd"}> : () -> ()
    %cst_24 = arith.constant dense<0.000000e+00> : vector<2x8x8xf32>
    %89 = tpu.matmul %88, %77, %cst_24 {dimension_numbers = #tpu.dot_dimension_numbers<[2], [1], [1], [2], [0, 0, 0, 1, 1, 2], [0], [0]>} : vector<2x8x8xf32>, vector<2x8x8xf32>, vector<2x8x8xf32> -> vector<2x8x8xf32>
    "tpu.trace_stop"() : () -> ()
    %90 = tpu.concatenate %44, %59, %74, %89 in 2 : vector<2x8x8xf32>, vector<2x8x8xf32>, vector<2x8x8xf32>, vector<2x8x8xf32> -> vector<2x8x32xf32>
    %91 = vector.shape_cast %90 : vector<2x8x32xf32> to vector<16x32xf32>
    %c0_25 = arith.constant 0 : index
    %c0_26 = arith.constant 0 : index
    %92 = vector.load %arg3[%c0_25, %c0_26] : memref<65x32xf32, #tpu.memory_space<vmem>>, vector<32x32xf32>
    %cst_27 = arith.constant dense<0.000000e+00> : vector<16x32xf32>
    %93 = tpu.matmul %91, %92, %cst_27 {dimension_numbers = #tpu.dot_dimension_numbers<[1], [0], [0], [1], [0, 0, 1, 1], [], []>} : vector<16x32xf32>, vector<32x32xf32>, vector<16x32xf32> -> vector<16x32xf32>
    %c32_28 = arith.constant 32 : index
    %c0_29 = arith.constant 0 : index
    %94 = vector.load %arg3[%c32_28, %c0_29] : memref<65x32xf32, #tpu.memory_space<vmem>>, vector<32x32xf32>
    %cst_30 = arith.constant dense<0.000000e+00> : vector<16x32xf32>
    %95 = tpu.matmul %18, %94, %cst_30 {dimension_numbers = #tpu.dot_dimension_numbers<[1], [0], [0], [1], [0, 0, 1, 1], [], []>} : vector<16x32xf32>, vector<32x32xf32>, vector<16x32xf32> -> vector<16x32xf32>
    %96 = arith.addf %93, %95 : vector<16x32xf32>
    %c64 = arith.constant 64 : index
    %c0_31 = arith.constant 0 : index
    %97 = vector.load %arg3[%c64, %c0_31] : memref<65x32xf32, #tpu.memory_space<vmem>>, vector<1x32xf32>
    %98 = vector.broadcast %97 : vector<1x32xf32> to vector<16x32xf32>
    %99 = arith.addf %96, %98 : vector<16x32xf32>
    %100 = vector.shape_cast %99 : vector<16x32xf32> to vector<2x8x32xf32>
    %cst_32 = arith.constant dense<0xFF800000> : vector<2x32xf32>
    %101 = vector.multi_reduction <maximumf>, %100, %cst_32 [1] : vector<2x8x32xf32> to vector<2x32xf32>
    %c0_33 = arith.constant 0 : index
    %c0_34 = arith.constant 0 : index
    %c0_35 = arith.constant 0 : index
    %102 = vector.load %arg4[%c0_33, %c0_34, %c0_35] : memref<1x2x32xf32, #tpu.memory_space<vmem>>, vector<1x2x32xf32>
    %103 = vector.shape_cast %102 : vector<1x2x32xf32> to vector<2x32xf32>
    %104 = vector.shape_cast %101 : vector<2x32xf32> to vector<1x2x32xf32>
    tpu.vector_store %arg4[%c0_33, %c0_34, %c0_35], %104 {strides = array<i32>} : memref<1x2x32xf32, #tpu.memory_space<vmem>>, vector<1x2x32xf32>,
    return
  }
  func.func @transform_0(%arg0: i32) -> (i32, i32) {
    %c0_i32 = arith.constant 0 : i32
    %c0_i32_0 = arith.constant 0 : i32
    return %arg0, %c0_i32 : i32, i32
  }
  func.func @transform_1(%arg0: i32) -> (i32, i32) {
    %c0_i32 = arith.constant 0 : i32
    %c0_i32_0 = arith.constant 0 : i32
    %c0_i32_1 = arith.constant 0 : i32
    return %c0_i32, %c0_i32_0 : i32, i32
  }
  func.func @transform_2(%arg0: i32) -> (i32, i32) {
    %c0_i32 = arith.constant 0 : i32
    %c0_i32_0 = arith.constant 0 : i32
    %c0_i32_1 = arith.constant 0 : i32
    return %c0_i32, %c0_i32_0 : i32, i32
  }
  func.func @transform_3(%arg0: i32) -> (i32, i32, i32) {
    %c0_i32 = arith.constant 0 : i32
    %c0_i32_0 = arith.constant 0 : i32
    %c0_i32_1 = arith.constant 0 : i32
    return %arg0, %c0_i32, %c0_i32_0 : i32, i32, i32
  }
}

</mosaic_0001>

<llo_original>
// kernel: tpu_custom_call.1
$region0: #{tpu_custom_call.1}
  #allocation0 [shape = 'u32[]', space=smem, size = 0x4, offset = 0x4, fixed_abs, tag = 'smem constant byte address 0x4 - core index']
  #allocation1 [shape = 'u32[72,128]{1,0:T(1,128)}', space=vmem, size = 0x9000, scoped, tag = 'internal scratch']
  %s0 = inlined_call_operand.vmem [shape: f32[16,32], index: 0, kind: input, shape index: {}]
  %s1 = inlined_call_operand.vmem [shape: f32[33,96], index: 1, kind: input, shape index: {}]
  %s2 = inlined_call_operand.vmem [shape: f32[65,32], index: 2, kind: input, shape index: {}]
  %s3 = inlined_call_operand.hbm [shape: f32[1,2,32], index: 3, kind: output, shape index: {}]
  %s4 = sld [smem:[#allocation0]]
  $region22: #{tpu_custom_call.1} parent=0
    _
  %s6 = ssub.s32 1, %s4
  %s7 = scalar_select 0, %s6, %s4
  $region1: #{tpu_custom_call.1} parent=0
    #allocation2 [shape = 'u8[1024]{0}', space=vmem, size = 0x400, scoped, tag = 'output window, operand 0, single buffered']
    #allocation3 [shape = 's32[1]{0}', space=sflag, size = 0x4, scoped, tag = 'scoped memory for tpu_custom_call.1']
    %8 = vsyncpa [#allocation3], 0
    // Predicated region
    $region2: #{tpu_custom_call.1} parent=1 // pred_check
      _
    $region3: #{tpu_custom_call.1} parent=1 // pred_check_branch
      %10 = sbr.rel (0) target = $region5
    $region4: #{tpu_custom_call.1} parent=1 // pred_region
      _
    $region5: #{tpu_custom_call.1} parent=1 // pred_fallthru
      _
    // Predicated region
    $region6: #{tpu_custom_call.1} parent=1 // pred_check
      _
    $region7: #{tpu_custom_call.1} parent=1 // pred_check_branch
      %12 = sbr.rel (0) target = $region9
    $region8: #{tpu_custom_call.1} parent=1 // pred_region
      _
    $region9: #{tpu_custom_call.1} parent=1 // pred_fallthru
      _
    // Predicated region
    $region10: #{tpu_custom_call.1} parent=1 // pred_check
      _
    $region11: #{tpu_custom_call.1} parent=1 // pred_check_branch
      %14 = sbr.rel (0) target = $region13
    $region12: #{tpu_custom_call.1} parent=1 // pred_region
      _
    $region13: #{tpu_custom_call.1} parent=1 // pred_fallthru
      _
    %v15 = vld [vmem:[%s0] sm:$0xff]
    %v16 = vld [vmem:[%s0 + $0x8] sm:$0xff]
    %vm17 = vcmask 261120
    %v18 = vsel %vm17, %v15, 0.0
    %19 = vadd.xlane.f32.xlu0 %v18
    %v20 = vpop.xlane.xlu0 %19
    %v21 = vsel %vm17, %v16, 0.0
    %22 = vadd.xlane.f32.xlu0 %v21
    %v23 = vpop.xlane.xlu0 %22
    %v24 = vrcp.pop 32.0
    %v25 = vmul.f32 32.0, %v24
    %v26 = vsub.f32 1.0, %v25
    %v27 = vmul.f32 %v24, %v26
    %v28 = vadd.f32 %v24, %v27
    %vm29 = vweird.f32 %v24
    %v30 = vsel %vm29, %v24, %v28
    %v31 = vmul.f32 %v20, %v30
    %v32 = vmul.f32 %v23, %v30
    %v33 = vsub.f32 %v15, %v31
    %v34 = vsub.f32 %v16, %v32
    %v35 = vmul.f32 %v33, %v33
    %v36 = vmul.f32 %v34, %v34
    %v37 = vsel %vm17, %v35, 0.0
    %38 = vadd.xlane.f32.xlu0 %v37
    %v39 = vpop.xlane.xlu0 %38
    %v40 = vsel %vm17, %v36, 0.0
    %41 = vadd.xlane.f32.xlu0 %v40
    %v42 = vpop.xlane.xlu0 %41
    %v43 = vmul.f32 %v39, %v30
    %v44 = vmul.f32 %v42, %v30
    %v45 = vadd.f32 %v43, 1e-05
    %v46 = vadd.f32 %v44, 1e-05
    %v47 = vrsqrt.pop %v45
    %v48 = vmul.f32 %v47, %v45
    %v49 = vmul.f32 %v48, %v47
    %v50 = vmul.f32 0.5, %v49
    %v51 = vsub.f32 1.5, %v50
    %v52 = vmul.f32 %v47, %v51
    %vm53 = vweird.f32 %v45
    %vm54 = vweird.f32 %v47
    %vm55 = vmor %vm53, %vm54
    %v56 = vsel %vm55, %v47, %v52
    %v57 = vrsqrt.pop %v46
    %v58 = vmul.f32 %v57, %v46
    %v59 = vmul.f32 %v58, %v57
    %v60 = vmul.f32 0.5, %v59
    %v61 = vsub.f32 1.5, %v60
    %v62 = vmul.f32 %v57, %v61
    %vm63 = vweird.f32 %v46
    %vm64 = vweird.f32 %v57
    %vm65 = vmor %vm63, %vm64
    %v66 = vsel %vm65, %v57, %v62
    %v67 = vmul.f32 %v33, %v56
    %v68 = vmul.f32 %v34, %v66
    %v69 = vld [vmem:[%s1] sm:$0xff]
    %v70 = vld [vmem:[%s1 + $0x8] sm:$0xff]
    %v71 = vld [vmem:[%s1 + $0x10] sm:$0xff]
    %v72 = vld [vmem:[%s1 + $0x18] sm:$0xff]
    %v73 = vld [vmem:[%s1 + $0x20] sm:$0x1]
    %v74 = vperm.slane %v73, 0
    %v76 = vsel %vm17, %v67, 0
    %v79 = vsel %vm17, %v68, 0
    %81 = vmatpush.msra.mxu0 0.0
    %82 = vmatpush.msra.mxu0 0.0
    %83 = vmatpush.msra.mxu0 0.0
    %84 = vmatpush.msra.mxu0 0.0
    %85 = vmatpush.msra.mxu0 0.0
    %86 = vmatpush.msra.mxu0 0.0
    %87 = vmatpush.msra.mxu0 0.0
    %88 = vmatpush.msra.mxu0 0.0
    %89 = vmatpush.msra.mxu0 0.0
    %90 = vmatpush.msra.mxu0 0.0
    %91 = vmatpush.msra.mxu0 0.0
    %92 = vmatpush.msra.mxu0 0.0
    %93 = vmatpush.msra.mxu0 %v72
    %94 = vmatpush.msra.mxu0 %v71
    %95 = vmatpush.msra.mxu0 %v70
    %96 = vmatpush.msra.mxu0 %v69
    %97 = vmatmul.f32.gmra.mxu0 %v76
    %v98 = vpop.f32.mrf.mxu0
    %v99 = vadd.f32 %v74, %v98
    %100 = vmatmul.f32.gmra.mxu0 %v79
    %v101 = vpop.f32.mrf.mxu0
    %v102 = vadd.f32 %v74, %v101
    %103 = vdwg.mxu0
    %105 = vrot.lane.b32.xlu0 %v99, 96
    %v106 = vpop.permute.xlu0 %105
    %vm107 = vcmask 64512
    %v108 = vsel %vm107, %v99, 0
    %v110 = vsel %vm107, %v106, 0
    %112 = vmatpush.xpose.msra.mxu0 0.0
    %113 = vmatpush.xpose.msra.mxu0 0.0
    %114 = vmatpush.xpose.msra.mxu0 0.0
    %115 = vmatpush.xpose.msra.mxu0 0.0
    %116 = vmatpush.xpose.msra.mxu0 0.0
    %117 = vmatpush.xpose.msra.mxu0 0.0
    %118 = vmatpush.xpose.msra.mxu0 0.0
    %119 = vmatpush.xpose.msra.mxu0 0.0
    %120 = vmatpush.xpose.msra.mxu0 0.0
    %121 = vmatpush.xpose.msra.mxu0 0.0
    %122 = vmatpush.xpose.msra.mxu0 0.0
    %123 = vmatpush.xpose.msra.mxu0 0.0
    %124 = vmatpush.xpose.msra.mxu0 0.0
    %125 = vmatpush.xpose.msra.mxu0 0.0
    %126 = vmatpush.xpose.msra.mxu0 0.0
    %127 = vmatpush.xpose.msra.mxu0 %v110
    %128 = vmatmul.f32.gmra.mxu0 %v108
    %v129 = vpop.f32.mrf.mxu0
    %v130 = vadd.f32 0.0, %v129
    %131 = vdwg.mxu0
    %133 = vrot.lane.b32.xlu0 %v102, 96
    %v134 = vpop.permute.xlu0 %133
    %v135 = vsel %vm107, %v102, 0
    %v137 = vsel %vm107, %v134, 0
    %139 = vmatpush.xpose.msra.mxu0 0.0
    %140 = vmatpush.xpose.msra.mxu0 0.0
    %141 = vmatpush.xpose.msra.mxu0 0.0
    %142 = vmatpush.xpose.msra.mxu0 0.0
    %143 = vmatpush.xpose.msra.mxu0 0.0
    %144 = vmatpush.xpose.msra.mxu0 0.0
    %145 = vmatpush.xpose.msra.mxu0 0.0
    %146 = vmatpush.xpose.msra.mxu0 0.0
    %147 = vmatpush.xpose.msra.mxu0 0.0
    %148 = vmatpush.xpose.msra.mxu0 0.0
    %149 = vmatpush.xpose.msra.mxu0 0.0
    %150 = vmatpush.xpose.msra.mxu0 0.0
    %151 = vmatpush.xpose.msra.mxu0 0.0
    %152 = vmatpush.xpose.msra.mxu0 0.0
    %153 = vmatpush.xpose.msra.mxu0 0.0
    %154 = vmatpush.xpose.msra.mxu0 %v137
    %155 = vmatmul.f32.gmra.mxu0 %v135
    %v156 = vpop.f32.mrf.mxu0
    %v157 = vadd.f32 0.0, %v156
    %158 = vdwg.mxu0
    %v159 = vsel %vm107, %v130, -inf
    %160 = vmax.xlane.f32.xlu0 %v159
    %v161 = vpop.xlane.xlu0 %160
    %v162 = vsel %vm107, %v157, -inf
    %163 = vmax.xlane.f32.xlu0 %v162
    %v164 = vpop.xlane.xlu0 %163
    %v165 = vsub.f32 %v130, %v161
    %v166 = vsub.f32 %v157, %v164
    %v167 = vmul.f32 %v165, 1.442695
    %v168 = vpow.pop %v167
    %v169 = vmul.f32 %v166, 1.442695
    %v170 = vpow.pop %v169
    %v171 = vsel %vm107, %v168, 0.0
    %172 = vadd.xlane.f32.xlu0 %v171
    %v173 = vpop.xlane.xlu0 %172
    %v174 = vsel %vm107, %v170, 0.0
    %175 = vadd.xlane.f32.xlu0 %v174
    %v176 = vpop.xlane.xlu0 %175
    %v177 = vrcp.pop %v173
    %v178 = vmul.f32 %v173, %v177
    %v179 = vsub.f32 1.0, %v178
    %v180 = vmul.f32 %v177, %v179
    %v181 = vadd.f32 %v177, %v180
    %vm182 = vweird.f32 %v173
    %vm183 = vweird.f32 %v177
    %vm184 = vmor %vm182, %vm183
    %v185 = vsel %vm184, %v177, %v181
    %v186 = vand.u32 2147483647, %v173
    %vm187 = vcmp.eq.f32.partialorder %v186, 8.507059e+37
    %v188 = vand.u32 %v173, 2147483648
    %v189 = vor.u32 1.1754944e-38, %v188
    %v190 = vsel %vm187, %v189, %v185
    %v191 = vrcp.pop %v176
    %v192 = vmul.f32 %v176, %v191
    %v193 = vsub.f32 1.0, %v192
    %v194 = vmul.f32 %v191, %v193
    %v195 = vadd.f32 %v191, %v194
    %vm196 = vweird.f32 %v176
    %vm197 = vweird.f32 %v191
    %vm198 = vmor %vm196, %vm197
    %v199 = vsel %vm198, %v191, %v195
    %v200 = vand.u32 2147483647, %v176
    %vm201 = vcmp.eq.f32.partialorder %v200, 8.507059e+37
    %v202 = vand.u32 %v176, 2147483648
    %v203 = vor.u32 1.1754944e-38, %v202
    %v204 = vsel %vm201, %v203, %v199
    %v205 = vmul.f32 %v168, %v190
    %v206 = vmul.f32 %v170, %v204
    %207 = vrot.lane.b32.xlu0 %v99, 64
    %v208 = vpop.permute.xlu0 %207
    %v211 = vsel %vm107, %v205, 0
    %213 = vmatpush.msra.mxu0 0.0
    %214 = vmatpush.msra.mxu0 0.0
    %215 = vmatpush.msra.mxu0 0.0
    %216 = vmatpush.msra.mxu0 0.0
    %217 = vmatpush.msra.mxu0 0.0
    %218 = vmatpush.msra.mxu0 0.0
    %219 = vmatpush.msra.mxu0 0.0
    %220 = vmatpush.msra.mxu0 0.0
    %221 = vmatpush.msra.mxu0 0.0
    %222 = vmatpush.msra.mxu0 0.0
    %223 = vmatpush.msra.mxu0 0.0
    %224 = vmatpush.msra.mxu0 0.0
    %225 = vmatpush.msra.mxu0 0.0
    %226 = vmatpush.msra.mxu0 0.0
    %227 = vmatpush.msra.mxu0 0.0
    %228 = vmatpush.msra.mxu0 %v208
    %229 = vmatmul.f32.gmra.mxu0 %v211
    %v230 = vpop.f32.mrf.mxu0
    %v231 = vadd.f32 0.0, %v230
    %232 = vdwg.mxu0
    %233 = vrot.lane.b32.xlu0 %v102, 64
    %v234 = vpop.permute.xlu0 %233
    %v237 = vsel %vm107, %v206, 0
    %239 = vmatpush.msra.mxu0 0.0
    %240 = vmatpush.msra.mxu0 0.0
    %241 = vmatpush.msra.mxu0 0.0
    %242 = vmatpush.msra.mxu0 0.0
    %243 = vmatpush.msra.mxu0 0.0
    %244 = vmatpush.msra.mxu0 0.0
    %245 = vmatpush.msra.mxu0 0.0
    %246 = vmatpush.msra.mxu0 0.0
    %247 = vmatpush.msra.mxu0 0.0
    %248 = vmatpush.msra.mxu0 0.0
    %249 = vmatpush.msra.mxu0 0.0
    %250 = vmatpush.msra.mxu0 0.0
    %251 = vmatpush.msra.mxu0 0.0
    %252 = vmatpush.msra.mxu0 0.0
    %253 = vmatpush.msra.mxu0 0.0
    %254 = vmatpush.msra.mxu0 %v234
    %255 = vmatmul.f32.gmra.mxu0 %v237
    %v256 = vpop.f32.mrf.mxu0
    %v257 = vadd.f32 0.0, %v256
    %258 = vdwg.mxu0
    %259 = vrot.lane.b32.xlu0 %v99, 120
    %v260 = vpop.permute.xlu0 %259
    %261 = vrot.lane.b32.xlu0 %v99, 88
    %v262 = vpop.permute.xlu0 %261
    %v263 = vsel %vm107, %v260, 0
    %v265 = vsel %vm107, %v262, 0
    %267 = vmatpush.xpose.msra.mxu0 0.0
    %268 = vmatpush.xpose.msra.mxu0 0.0
    %269 = vmatpush.xpose.msra.mxu0 0.0
    %270 = vmatpush.xpose.msra.mxu0 0.0
    %271 = vmatpush.xpose.msra.mxu0 0.0
    %272 = vmatpush.xpose.msra.mxu0 0.0
    %273 = vmatpush.xpose.msra.mxu0 0.0
    %274 = vmatpush.xpose.msra.mxu0 0.0
    %275 = vmatpush.xpose.msra.mxu0 0.0
    %276 = vmatpush.xpose.msra.mxu0 0.0
    %277 = vmatpush.xpose.msra.mxu0 0.0
    %278 = vmatpush.xpose.msra.mxu0 0.0
    %279 = vmatpush.xpose.msra.mxu0 0.0
    %280 = vmatpush.xpose.msra.mxu0 0.0
    %281 = vmatpush.xpose.msra.mxu0 0.0
    %282 = vmatpush.xpose.msra.mxu0 %v265
    %283 = vmatmul.f32.gmra.mxu0 %v263
    %v284 = vpop.f32.mrf.mxu0
    %v285 = vadd.f32 0.0, %v284
    %286 = vdwg.mxu0
    %287 = vrot.lane.b32.xlu0 %v102, 120
    %v288 = vpop.permute.xlu0 %287
    %289 = vrot.lane.b32.xlu0 %v102, 88
    %v290 = vpop.permute.xlu0 %289
    %v291 = vsel %vm107, %v288, 0
    %v293 = vsel %vm107, %v290, 0
    %295 = vmatpush.xpose.msra.mxu0 0.0
    %296 = vmatpush.xpose.msra.mxu0 0.0
    %297 = vmatpush.xpose.msra.mxu0 0.0
    %298 = vmatpush.xpose.msra.mxu0 0.0
    %299 = vmatpush.xpose.msra.mxu0 0.0
    %300 = vmatpush.xpose.msra.mxu0 0.0
    %301 = vmatpush.xpose.msra.mxu0 0.0
    %302 = vmatpush.xpose.msra.mxu0 0.0
    %303 = vmatpush.xpose.msra.mxu0 0.0
    %304 = vmatpush.xpose.msra.mxu0 0.0
    %305 = vmatpush.xpose.msra.mxu0 0.0
    %306 = vmatpush.xpose.msra.mxu0 0.0
    %307 = vmatpush.xpose.msra.mxu0 0.0
    %308 = vmatpush.xpose.msra.mxu0 0.0
    %309 = vmatpush.xpose.msra.mxu0 0.0
    %310 = vmatpush.xpose.msra.mxu0 %v293
    %311 = vmatmul.f32.gmra.mxu0 %v291
    %v312 = vpop.f32.mrf.mxu0
    %v313 = vadd.f32 0.0, %v312
    %314 = vdwg.mxu0
    %v315 = vsel %vm107, %v285, -inf
    %316 = vmax.xlane.f32.xlu0 %v315
    %v317 = vpop.xlane.xlu0 %316
    %v318 = vsel %vm107, %v313, -inf
    %319 = vmax.xlane.f32.xlu0 %v318
    %v320 = vpop.xlane.xlu0 %319
    %v321 = vsub.f32 %v285, %v317
    %v322 = vsub.f32 %v313, %v320
    %v323 = vmul.f32 %v321, 1.442695
    %v324 = vpow.pop %v323
    %v325 = vmul.f32 %v322, 1.442695
    %v326 = vpow.pop %v325
    %v327 = vsel %vm107, %v324, 0.0
    %328 = vadd.xlane.f32.xlu0 %v327
    %v329 = vpop.xlane.xlu0 %328
    %v330 = vsel %vm107, %v326, 0.0
    %331 = vadd.xlane.f32.xlu0 %v330
    %v332 = vpop.xlane.xlu0 %331
    %v333 = vrcp.pop %v329
    %v334 = vmul.f32 %v329, %v333
    %v335 = vsub.f32 1.0, %v334
    %v336 = vmul.f32 %v333, %v335
    %v337 = vadd.f32 %v333, %v336
    %vm338 = vweird.f32 %v329
    %vm339 = vweird.f32 %v333
    %vm340 = vmor %vm338, %vm339
    %v341 = vsel %vm340, %v333, %v337
    %v342 = vand.u32 2147483647, %v329
    %vm343 = vcmp.eq.f32.partialorder %v342, 8.507059e+37
    %v344 = vand.u32 %v329, 2147483648
    %v345 = vor.u32 1.1754944e-38, %v344
    %v346 = vsel %vm343, %v345, %v341
    %v347 = vrcp.pop %v332
    %v348 = vmul.f32 %v332, %v347
    %v349 = vsub.f32 1.0, %v348
    %v350 = vmul.f32 %v347, %v349
    %v351 = vadd.f32 %v347, %v350
    %vm352 = vweird.f32 %v332
    %vm353 = vweird.f32 %v347
    %vm354 = vmor %vm352, %vm353
    %v355 = vsel %vm354, %v347, %v351
    %v356 = vand.u32 2147483647, %v332
    %vm357 = vcmp.eq.f32.partialorder %v356, 8.507059e+37
    %v358 = vand.u32 %v332, 2147483648
    %v359 = vor.u32 1.1754944e-38, %v358
    %v360 = vsel %vm357, %v359, %v355
    %v361 = vmul.f32 %v324, %v346
    %v362 = vmul.f32 %v326, %v360
    %363 = vrot.lane.b32.xlu0 %v99, 56
    %v364 = vpop.permute.xlu0 %363
    %v367 = vsel %vm107, %v361, 0
    %369 = vmatpush.msra.mxu0 0.0
    %370 = vmatpush.msra.mxu0 0.0
    %371 = vmatpush.msra.mxu0 0.0
    %372 = vmatpush.msra.mxu0 0.0
    %373 = vmatpush.msra.mxu0 0.0
    %374 = vmatpush.msra.mxu0 0.0
    %375 = vmatpush.msra.mxu0 0.0
    %376 = vmatpush.msra.mxu0 0.0
    %377 = vmatpush.msra.mxu0 0.0
    %378 = vmatpush.msra.mxu0 0.0
    %379 = vmatpush.msra.mxu0 0.0
    %380 = vmatpush.msra.mxu0 0.0
    %381 = vmatpush.msra.mxu0 0.0
    %382 = vmatpush.msra.mxu0 0.0
    %383 = vmatpush.msra.mxu0 0.0
    %384 = vmatpush.msra.mxu0 %v364
    %385 = vmatmul.f32.gmra.mxu0 %v367
    %v386 = vpop.f32.mrf.mxu0
    %v387 = vadd.f32 0.0, %v386
    %388 = vdwg.mxu0
    %389 = vrot.lane.b32.xlu0 %v102, 56
    %v390 = vpop.permute.xlu0 %389
    %v393 = vsel %vm107, %v362, 0
    %395 = vmatpush.msra.mxu0 0.0
    %396 = vmatpush.msra.mxu0 0.0
    %397 = vmatpush.msra.mxu0 0.0
    %398 = vmatpush.msra.mxu0 0.0
    %399 = vmatpush.msra.mxu0 0.0
    %400 = vmatpush.msra.mxu0 0.0
    %401 = vmatpush.msra.mxu0 0.0
    %402 = vmatpush.msra.mxu0 0.0
    %403 = vmatpush.msra.mxu0 0.0
    %404 = vmatpush.msra.mxu0 0.0
    %405 = vmatpush.msra.mxu0 0.0
    %406 = vmatpush.msra.mxu0 0.0
    %407 = vmatpush.msra.mxu0 0.0
    %408 = vmatpush.msra.mxu0 0.0
    %409 = vmatpush.msra.mxu0 0.0
    %410 = vmatpush.msra.mxu0 %v390
    %411 = vmatmul.f32.gmra.mxu0 %v393
    %v412 = vpop.f32.mrf.mxu0
    %v413 = vadd.f32 0.0, %v412
    %414 = vdwg.mxu0
    %415 = vrot.lane.b32.xlu0 %v99, 112
    %v416 = vpop.permute.xlu0 %415
    %417 = vrot.lane.b32.xlu0 %v99, 80
    %v418 = vpop.permute.xlu0 %417
    %v419 = vsel %vm107, %v416, 0
    %v421 = vsel %vm107, %v418, 0
    %423 = vmatpush.xpose.msra.mxu0 0.0
    %424 = vmatpush.xpose.msra.mxu0 0.0
    %425 = vmatpush.xpose.msra.mxu0 0.0
    %426 = vmatpush.xpose.msra.mxu0 0.0
    %427 = vmatpush.xpose.msra.mxu0 0.0
    %428 = vmatpush.xpose.msra.mxu0 0.0
    %429 = vmatpush.xpose.msra.mxu0 0.0
    %430 = vmatpush.xpose.msra.mxu0 0.0
    %431 = vmatpush.xpose.msra.mxu0 0.0
    %432 = vmatpush.xpose.msra.mxu0 0.0
    %433 = vmatpush.xpose.msra.mxu0 0.0
    %434 = vmatpush.xpose.msra.mxu0 0.0
    %435 = vmatpush.xpose.msra.mxu0 0.0
    %436 = vmatpush.xpose.msra.mxu0 0.0
    %437 = vmatpush.xpose.msra.mxu0 0.0
    %438 = vmatpush.xpose.msra.mxu0 %v421
    %439 = vmatmul.f32.gmra.mxu0 %v419
    %v440 = vpop.f32.mrf.mxu0
    %v441 = vadd.f32 0.0, %v440
    %442 = vdwg.mxu0
    %443 = vrot.lane.b32.xlu0 %v102, 112
    %v444 = vpop.permute.xlu0 %443
    %445 = vrot.lane.b32.xlu0 %v102, 80
    %v446 = vpop.permute.xlu0 %445
    %v447 = vsel %vm107, %v444, 0
    %v449 = vsel %vm107, %v446, 0
    %451 = vmatpush.xpose.msra.mxu0 0.0
    %452 = vmatpush.xpose.msra.mxu0 0.0
    %453 = vmatpush.xpose.msra.mxu0 0.0
    %454 = vmatpush.xpose.msra.mxu0 0.0
    %455 = vmatpush.xpose.msra.mxu0 0.0
    %456 = vmatpush.xpose.msra.mxu0 0.0
    %457 = vmatpush.xpose.msra.mxu0 0.0
    %458 = vmatpush.xpose.msra.mxu0 0.0
    %459 = vmatpush.xpose.msra.mxu0 0.0
    %460 = vmatpush.xpose.msra.mxu0 0.0
    %461 = vmatpush.xpose.msra.mxu0 0.0
    %462 = vmatpush.xpose.msra.mxu0 0.0
    %463 = vmatpush.xpose.msra.mxu0 0.0
    %464 = vmatpush.xpose.msra.mxu0 0.0
    %465 = vmatpush.xpose.msra.mxu0 0.0
    %466 = vmatpush.xpose.msra.mxu0 %v449
    %467 = vmatmul.f32.gmra.mxu0 %v447
    %v468 = vpop.f32.mrf.mxu0
    %v469 = vadd.f32 0.0, %v468
    %470 = vdwg.mxu0
    %v471 = vsel %vm107, %v441, -inf
    %472 = vmax.xlane.f32.xlu0 %v471
    %v473 = vpop.xlane.xlu0 %472
    %v474 = vsel %vm107, %v469, -inf
    %475 = vmax.xlane.f32.xlu0 %v474
    %v476 = vpop.xlane.xlu0 %475
    %v477 = vsub.f32 %v441, %v473
    %v478 = vsub.f32 %v469, %v476
    %v479 = vmul.f32 %v477, 1.442695
    %v480 = vpow.pop %v479
    %v481 = vmul.f32 %v478, 1.442695
    %v482 = vpow.pop %v481
    %v483 = vsel %vm107, %v480, 0.0
    %484 = vadd.xlane.f32.xlu0 %v483
    %v485 = vpop.xlane.xlu0 %484
    %v486 = vsel %vm107, %v482, 0.0
    %487 = vadd.xlane.f32.xlu0 %v486
    %v488 = vpop.xlane.xlu0 %487
    %v489 = vrcp.pop %v485
    %v490 = vmul.f32 %v485, %v489
    %v491 = vsub.f32 1.0, %v490
    %v492 = vmul.f32 %v489, %v491
    %v493 = vadd.f32 %v489, %v492
    %vm494 = vweird.f32 %v485
    %vm495 = vweird.f32 %v489
    %vm496 = vmor %vm494, %vm495
    %v497 = vsel %vm496, %v489, %v493
    %v498 = vand.u32 2147483647, %v485
    %vm499 = vcmp.eq.f32.partialorder %v498, 8.507059e+37
    %v500 = vand.u32 %v485, 2147483648
    %v501 = vor.u32 1.1754944e-38, %v500
    %v502 = vsel %vm499, %v501, %v497
    %v503 = vrcp.pop %v488
    %v504 = vmul.f32 %v488, %v503
    %v505 = vsub.f32 1.0, %v504
    %v506 = vmul.f32 %v503, %v505
    %v507 = vadd.f32 %v503, %v506
    %vm508 = vweird.f32 %v488
    %vm509 = vweird.f32 %v503
    %vm510 = vmor %vm508, %vm509
    %v511 = vsel %vm510, %v503, %v507
    %v512 = vand.u32 2147483647, %v488
    %vm513 = vcmp.eq.f32.partialorder %v512, 8.507059e+37
    %v514 = vand.u32 %v488, 2147483648
    %v515 = vor.u32 1.1754944e-38, %v514
    %v516 = vsel %vm513, %v515, %v511
    %v517 = vmul.f32 %v480, %v502
    %v518 = vmul.f32 %v482, %v516
    %519 = vrot.lane.b32.xlu0 %v99, 48
    %v520 = vpop.permute.xlu0 %519
    %v523 = vsel %vm107, %v517, 0
    %525 = vmatpush.msra.mxu0 0.0
    %526 = vmatpush.msra.mxu0 0.0
    %527 = vmatpush.msra.mxu0 0.0
    %528 = vmatpush.msra.mxu0 0.0
    %529 = vmatpush.msra.mxu0 0.0
    %530 = vmatpush.msra.mxu0 0.0
    %531 = vmatpush.msra.mxu0 0.0
    %532 = vmatpush.msra.mxu0 0.0
    %533 = vmatpush.msra.mxu0 0.0
    %534 = vmatpush.msra.mxu0 0.0
    %535 = vmatpush.msra.mxu0 0.0
    %536 = vmatpush.msra.mxu0 0.0
    %537 = vmatpush.msra.mxu0 0.0
    %538 = vmatpush.msra.mxu0 0.0
    %539 = vmatpush.msra.mxu0 0.0
    %540 = vmatpush.msra.mxu0 %v520
    %541 = vmatmul.f32.gmra.mxu0 %v523
    %v542 = vpop.f32.mrf.mxu0
    %v543 = vadd.f32 0.0, %v542
    %544 = vdwg.mxu0
    %545 = vrot.lane.b32.xlu0 %v102, 48
    %v546 = vpop.permute.xlu0 %545
    %v549 = vsel %vm107, %v518, 0
    %551 = vmatpush.msra.mxu0 0.0
    %552 = vmatpush.msra.mxu0 0.0
    %553 = vmatpush.msra.mxu0 0.0
    %554 = vmatpush.msra.mxu0 0.0
    %555 = vmatpush.msra.mxu0 0.0
    %556 = vmatpush.msra.mxu0 0.0
    %557 = vmatpush.msra.mxu0 0.0
    %558 = vmatpush.msra.mxu0 0.0
    %559 = vmatpush.msra.mxu0 0.0
    %560 = vmatpush.msra.mxu0 0.0
    %561 = vmatpush.msra.mxu0 0.0
    %562 = vmatpush.msra.mxu0 0.0
    %563 = vmatpush.msra.mxu0 0.0
    %564 = vmatpush.msra.mxu0 0.0
    %565 = vmatpush.msra.mxu0 0.0
    %566 = vmatpush.msra.mxu0 %v546
    %567 = vmatmul.f32.gmra.mxu0 %v549
    %v568 = vpop.f32.mrf.mxu0
    %v569 = vadd.f32 0.0, %v568
    %570 = vdwg.mxu0
    %571 = vrot.lane.b32.xlu0 %v99, 104
    %v572 = vpop.permute.xlu0 %571
    %573 = vrot.lane.b32.xlu0 %v99, 72
    %v574 = vpop.permute.xlu0 %573
    %v575 = vsel %vm107, %v572, 0
    %v577 = vsel %vm107, %v574, 0
    %579 = vmatpush.xpose.msra.mxu0 0.0
    %580 = vmatpush.xpose.msra.mxu0 0.0
    %581 = vmatpush.xpose.msra.mxu0 0.0
    %582 = vmatpush.xpose.msra.mxu0 0.0
    %583 = vmatpush.xpose.msra.mxu0 0.0
    %584 = vmatpush.xpose.msra.mxu0 0.0
    %585 = vmatpush.xpose.msra.mxu0 0.0
    %586 = vmatpush.xpose.msra.mxu0 0.0
    %587 = vmatpush.xpose.msra.mxu0 0.0
    %588 = vmatpush.xpose.msra.mxu0 0.0
    %589 = vmatpush.xpose.msra.mxu0 0.0
    %590 = vmatpush.xpose.msra.mxu0 0.0
    %591 = vmatpush.xpose.msra.mxu0 0.0
    %592 = vmatpush.xpose.msra.mxu0 0.0
    %593 = vmatpush.xpose.msra.mxu0 0.0
    %594 = vmatpush.xpose.msra.mxu0 %v577
    %595 = vmatmul.f32.gmra.mxu0 %v575
    %v596 = vpop.f32.mrf.mxu0
    %v597 = vadd.f32 0.0, %v596
    %598 = vdwg.mxu0
    %599 = vrot.lane.b32.xlu0 %v102, 104
    %v600 = vpop.permute.xlu0 %599
    %601 = vrot.lane.b32.xlu0 %v102, 72
    %v602 = vpop.permute.xlu0 %601
    %v603 = vsel %vm107, %v600, 0
    %v605 = vsel %vm107, %v602, 0
    %607 = vmatpush.xpose.msra.mxu0 0.0
    %608 = vmatpush.xpose.msra.mxu0 0.0
    %609 = vmatpush.xpose.msra.mxu0 0.0
    %610 = vmatpush.xpose.msra.mxu0 0.0
    %611 = vmatpush.xpose.msra.mxu0 0.0
    %612 = vmatpush.xpose.msra.mxu0 0.0
    %613 = vmatpush.xpose.msra.mxu0 0.0
    %614 = vmatpush.xpose.msra.mxu0 0.0
    %615 = vmatpush.xpose.msra.mxu0 0.0
    %616 = vmatpush.xpose.msra.mxu0 0.0
    %617 = vmatpush.xpose.msra.mxu0 0.0
    %618 = vmatpush.xpose.msra.mxu0 0.0
    %619 = vmatpush.xpose.msra.mxu0 0.0
    %620 = vmatpush.xpose.msra.mxu0 0.0
    %621 = vmatpush.xpose.msra.mxu0 0.0
    %622 = vmatpush.xpose.msra.mxu0 %v605
    %623 = vmatmul.f32.gmra.mxu0 %v603
    %v624 = vpop.f32.mrf.mxu0
    %v625 = vadd.f32 0.0, %v624
    %626 = vdwg.mxu0
    %v627 = vsel %vm107, %v597, -inf
    %628 = vmax.xlane.f32.xlu0 %v627
    %v629 = vpop.xlane.xlu0 %628
    %v630 = vsel %vm107, %v625, -inf
    %631 = vmax.xlane.f32.xlu0 %v630
    %v632 = vpop.xlane.xlu0 %631
    %v633 = vsub.f32 %v597, %v629
    %v634 = vsub.f32 %v625, %v632
    %v635 = vmul.f32 %v633, 1.442695
    %v636 = vpow.pop %v635
    %v637 = vmul.f32 %v634, 1.442695
    %v638 = vpow.pop %v637
    %v639 = vsel %vm107, %v636, 0.0
    %640 = vadd.xlane.f32.xlu0 %v639
    %v641 = vpop.xlane.xlu0 %640
    %v642 = vsel %vm107, %v638, 0.0
    %643 = vadd.xlane.f32.xlu0 %v642
    %v644 = vpop.xlane.xlu0 %643
    %v645 = vrcp.pop %v641
    %v646 = vmul.f32 %v641, %v645
    %v647 = vsub.f32 1.0, %v646
    %v648 = vmul.f32 %v645, %v647
    %v649 = vadd.f32 %v645, %v648
    %vm650 = vweird.f32 %v641
    %vm651 = vweird.f32 %v645
    %vm652 = vmor %vm650, %vm651
    %v653 = vsel %vm652, %v645, %v649
    %v654 = vand.u32 2147483647, %v641
    %vm655 = vcmp.eq.f32.partialorder %v654, 8.507059e+37
    %v656 = vand.u32 %v641, 2147483648
    %v657 = vor.u32 1.1754944e-38, %v656
    %v658 = vsel %vm655, %v657, %v653
    %v659 = vrcp.pop %v644
    %v660 = vmul.f32 %v644, %v659
    %v661 = vsub.f32 1.0, %v660
    %v662 = vmul.f32 %v659, %v661
    %v663 = vadd.f32 %v659, %v662
    %vm664 = vweird.f32 %v644
    %vm665 = vweird.f32 %v659
    %vm666 = vmor %vm664, %vm665
    %v667 = vsel %vm666, %v659, %v663
    %v668 = vand.u32 2147483647, %v644
    %vm669 = vcmp.eq.f32.partialorder %v668, 8.507059e+37
    %v670 = vand.u32 %v644, 2147483648
    %v671 = vor.u32 1.1754944e-38, %v670
    %v672 = vsel %vm669, %v671, %v667
    %v673 = vmul.f32 %v636, %v658
    %v674 = vmul.f32 %v638, %v672
    %675 = vrot.lane.b32.xlu0 %v99, 40
    %v676 = vpop.permute.xlu0 %675
    %v679 = vsel %vm107, %v673, 0
    %681 = vmatpush.msra.mxu0 0.0
    %682 = vmatpush.msra.mxu0 0.0
    %683 = vmatpush.msra.mxu0 0.0
    %684 = vmatpush.msra.mxu0 0.0
    %685 = vmatpush.msra.mxu0 0.0
    %686 = vmatpush.msra.mxu0 0.0
    %687 = vmatpush.msra.mxu0 0.0
    %688 = vmatpush.msra.mxu0 0.0
    %689 = vmatpush.msra.mxu0 0.0
    %690 = vmatpush.msra.mxu0 0.0
    %691 = vmatpush.msra.mxu0 0.0
    %692 = vmatpush.msra.mxu0 0.0
    %693 = vmatpush.msra.mxu0 0.0
    %694 = vmatpush.msra.mxu0 0.0
    %695 = vmatpush.msra.mxu0 0.0
    %696 = vmatpush.msra.mxu0 %v676
    %697 = vmatmul.f32.gmra.mxu0 %v679
    %v698 = vpop.f32.mrf.mxu0
    %v699 = vadd.f32 0.0, %v698
    %700 = vdwg.mxu0
    %701 = vrot.lane.b32.xlu0 %v102, 40
    %v702 = vpop.permute.xlu0 %701
    %v705 = vsel %vm107, %v674, 0
    %707 = vmatpush.msra.mxu0 0.0
    %708 = vmatpush.msra.mxu0 0.0
    %709 = vmatpush.msra.mxu0 0.0
    %710 = vmatpush.msra.mxu0 0.0
    %711 = vmatpush.msra.mxu0 0.0
    %712 = vmatpush.msra.mxu0 0.0
    %713 = vmatpush.msra.mxu0 0.0
    %714 = vmatpush.msra.mxu0 0.0
    %715 = vmatpush.msra.mxu0 0.0
    %716 = vmatpush.msra.mxu0 0.0
    %717 = vmatpush.msra.mxu0 0.0
    %718 = vmatpush.msra.mxu0 0.0
    %719 = vmatpush.msra.mxu0 0.0
    %720 = vmatpush.msra.mxu0 0.0
    %721 = vmatpush.msra.mxu0 0.0
    %722 = vmatpush.msra.mxu0 %v702
    %723 = vmatmul.f32.gmra.mxu0 %v705
    %v724 = vpop.f32.mrf.mxu0
    %v725 = vadd.f32 0.0, %v724
    %726 = vdwg.mxu0
    %729 = vrot.lane.b32.xlu0 %v387, 8
    %v730 = vpop.permute.xlu0 %729
    %731 = vrot.lane.b32.xlu0 %v413, 8
    %v732 = vpop.permute.xlu0 %731
    %737 = vrot.lane.b32.xlu0 %v543, 16
    %v738 = vpop.permute.xlu0 %737
    %739 = vrot.lane.b32.xlu0 %v569, 16
    %v740 = vpop.permute.xlu0 %739
    %745 = vrot.lane.b32.xlu0 %v699, 24
    %v746 = vpop.permute.xlu0 %745
    %747 = vrot.lane.b32.xlu0 %v725, 24
    %v748 = vpop.permute.xlu0 %747
    %v751 = vsel %vm107, %v231, %v730
    %v752 = vsel %vm107, %v257, %v732
    %vm753 = vcmask 130048
    %v754 = vsel %vm753, %v751, %v738
    %v755 = vsel %vm753, %v752, %v740
    %vm756 = vcmask 195584
    %v757 = vsel %vm756, %v754, %v746
    %v758 = vsel %vm756, %v755, %v748
    %v759 = vld [vmem:[%s2] sm:$0xff]
    %v760 = vld [vmem:[%s2 + $0x8] sm:$0xff]
    %v761 = vld [vmem:[%s2 + $0x10] sm:$0xff]
    %v762 = vld [vmem:[%s2 + $0x18] sm:$0xff]
    %v763 = vld [vmem:[%s2 + $0x20] sm:$0xff]
    %v764 = vld [vmem:[%s2 + $0x28] sm:$0xff]
    %v765 = vld [vmem:[%s2 + $0x30] sm:$0xff]
    %v766 = vld [vmem:[%s2 + $0x38] sm:$0xff]
    %767 = vmatpush.msra.mxu0 0.0
    %768 = vmatpush.msra.mxu0 0.0
    %769 = vmatpush.msra.mxu0 0.0
    %770 = vmatpush.msra.mxu0 0.0
    %771 = vmatpush.msra.mxu0 0.0
    %772 = vmatpush.msra.mxu0 0.0
    %773 = vmatpush.msra.mxu0 0.0
    %774 = vmatpush.msra.mxu0 0.0
    %775 = vmatpush.msra.mxu0 0.0
    %776 = vmatpush.msra.mxu0 0.0
    %777 = vmatpush.msra.mxu0 0.0
    %778 = vmatpush.msra.mxu0 0.0
    %779 = vmatpush.msra.mxu0 %v766
    %780 = vmatpush.msra.mxu0 %v765
    %781 = vmatpush.msra.mxu0 %v764
    %782 = vmatpush.msra.mxu0 %v763
    %783 = vmatmul.f32.gmra.mxu0 %v76
    %v784 = vpop.f32.mrf.mxu0
    %v785 = vadd.f32 0.0, %v784
    %786 = vmatmul.f32.gmra.mxu0 %v79
    %v787 = vpop.f32.mrf.mxu0
    %v788 = vadd.f32 0.0, %v787
    %789 = vdwg.mxu0
    %v791 = vsel %vm17, %v757, 0
    %v794 = vsel %vm17, %v758, 0
    %796 = vmatpush.msra.mxu0 0.0
    %797 = vmatpush.msra.mxu0 0.0
    %798 = vmatpush.msra.mxu0 0.0
    %799 = vmatpush.msra.mxu0 0.0
    %800 = vmatpush.msra.mxu0 0.0
    %801 = vmatpush.msra.mxu0 0.0
    %802 = vmatpush.msra.mxu0 0.0
    %803 = vmatpush.msra.mxu0 0.0
    %804 = vmatpush.msra.mxu0 0.0
    %805 = vmatpush.msra.mxu0 0.0
    %806 = vmatpush.msra.mxu0 0.0
    %807 = vmatpush.msra.mxu0 0.0
    %808 = vmatpush.msra.mxu0 %v762
    %809 = vmatpush.msra.mxu0 %v761
    %810 = vmatpush.msra.mxu0 %v760
    %811 = vmatpush.msra.mxu0 %v759
    %812 = vmatmul.f32.gmra.mxu0 %v791
    %v813 = vpop.f32.mrf.mxu0
    %v814 = vadd.f32 %v785, %v813
    %815 = vmatmul.f32.gmra.mxu0 %v794
    %v816 = vpop.f32.mrf.mxu0
    %v817 = vadd.f32 %v788, %v816
    %818 = vdwg.mxu0
    %v819 = vld [vmem:[%s2 + $0x40] sm:$0x1]
    %v820 = vperm.slane %v819, 0
    %v821 = vadd.f32 %v814, %v820
    %v822 = vadd.f32 %v817, %v820
    %v823 = vsel %vm17, %v821, -inf
    %v824 = vrot.slane %v823, 4
    %v825 = vmax.f32 %v823, %v824
    %v826 = vrot.slane %v825, 2
    %v827 = vmax.f32 %v825, %v826
    %v828 = vrot.slane %v827, 1
    %v829 = vmax.f32 %v827, %v828
    %v830 = vsel %vm17, %v822, -inf
    %v831 = vrot.slane %v830, 4
    %v832 = vmax.f32 %v830, %v831
    %v833 = vrot.slane %v832, 2
    %v834 = vmax.f32 %v832, %v833
    %v835 = vrot.slane %v834, 1
    %v836 = vmax.f32 %v834, %v835
    %vm839 = vcmask 1041409
    %v840 = vsel %vm839, %v836, %v829
    %vm842 = vcmask 254976
    %843 = vst.msk [vmem:[#allocation2] sm:$0x3] %vm842, %v840
    // Predicated region
    $region14: #{tpu_custom_call.1} parent=1 // pred_check
      _
    $region15: #{tpu_custom_call.1} parent=1 // pred_check_branch
      %845 = sbr.rel (0) target = $region17
    $region16: #{tpu_custom_call.1} parent=1 // pred_region
      %847 = vsyncadd [#allocation3], 0
      %s849 = sshll.u32 [#allocation2], 4
      %s850 = int_to_ptr.vmem [resolvable:$true] %s849
      %s851 = sshll.u32 %s3, 4
      %s852 = int_to_ptr.hbm [resolvable:$true] %s851
      %854 = dma.vmem_to_hbm [thread:$0]  %s850, 32, %s852, [#allocation3]
    $region17: #{tpu_custom_call.1} parent=1 // pred_fallthru
      _
    // Predicated region
    $region18: #{tpu_custom_call.1} parent=1 // pred_check
      _
    $region19: #{tpu_custom_call.1} parent=1 // pred_check_branch
      %856 = sbr.rel (0) target = $region21
    $region20: #{tpu_custom_call.1} parent=1 // pred_region
      %858 = dma.done [#allocation3], 32
    $region21: #{tpu_custom_call.1} parent=1 // pred_fallthru
      _
    %859 = vsyncpa [#allocation3], 1

</llo_original>
